<compile_context>
chip_gen: v7x
topology: tpu7x:2x2x1
jax: 0.10.0
libtpu: 0.0.40
codegen_flags: <defaults>
</compile_context>

<pallas_src>
import jax
import jax.numpy as jnp
from jax.experimental import pallas as pl
from jax.experimental.pallas import tpu as pltpu


# ----------------------------------------------------------------------------
# Kernel
# ----------------------------------------------------------------------------
def _imfeat2wordvec_kernel(x_ref, wt_ref, b_ref, o_ref):
    # x_ref : (Bt, C, HW)   wt_ref : (C, D)   b_ref : (1, D)   o_ref : (Bt, 1, D)
    hw = x_ref.shape[-1]

    # Global average pool over the spatial axis, accumulated in f32 without
    # materializing a full f32 copy of the tile.
    pooled = jnp.sum(x_ref[...], axis=-1, dtype=jnp.float32) * jnp.float32(1.0 / hw)
    # pooled: (Bt, C) f32

    # Keep the (large, resident) weight in its native dtype; only cast the tiny
    # pooled activations when the weight is low precision (native bf16 MXU path).
    w = wt_ref[...]
    lhs = pooled if w.dtype == jnp.float32 else pooled.astype(w.dtype)
    y = jnp.dot(lhs, w, preferred_element_type=jnp.float32)          # (Bt, D) f32
    y = y + b_ref[...].astype(jnp.float32)                           # broadcast (1, D)

    o_ref[...] = y.reshape(o_ref.shape).astype(o_ref.dtype)


# ----------------------------------------------------------------------------
# Tiling / VMEM planning helpers
# ----------------------------------------------------------------------------
def _cdiv(a, b):
    return -(-a // b)


def _roundup(a, m):
    return _cdiv(a, m) * m


def _sublane_mult(dtype):
    # second-to-last dim packing: 8 (f32) / 16 (bf16) / 32 (int8/fp8)
    return max(8, 32 // jnp.dtype(dtype).itemsize)


def _tpu_generation():
    try:
        kind = jax.devices()[0].device_kind.lower()
    except Exception:
        kind = ""
    if "v7" in kind or "7x" in kind:
        return "v7x"
    if "v6" in kind:
        return "v6e"
    if "v5" in kind:
        return "v5e"
    return "unknown"


def _vmem_plan():
    gen = _tpu_generation()
    if gen in ("v5e", "v6e"):
        # 128 MiB physical VMEM: be generous so grid steps are few and large.
        return {"budget": 80 << 20, "vmem_limit": 100 << 20, "num_cores": 1}
    if gen == "v7x":
        # 64 MiB VMEM per TensorCore, 2 TCs: cap resident footprint well below.
        return {"budget": 40 << 20, "vmem_limit": 48 << 20, "num_cores": 2}
    # Unknown chip: conservative (v7x-sized) plan, single core assumed.
    return {"budget": 40 << 20, "vmem_limit": 48 << 20, "num_cores": 1}


def _choose_batch_tile(B, C, HW, D, x_dtype, w_dtype, b_dtype, out_dtype, plan):
    """Pick Bt against the *padded*, double-buffered VMEM footprint."""
    x_item = jnp.dtype(x_dtype).itemsize
    # Padded footprint of one batch row of the x block: last two dims (C, HW)
    # are tiled to (sublane, 128) multiples in VMEM.
    x_row = _roundup(C, _sublane_mult(x_dtype)) * _roundup(HW, 128) * x_item
    out_row = (_roundup(1, _sublane_mult(out_dtype)) * _roundup(D, 128)
               * jnp.dtype(out_dtype).itemsize)
    # Weight/bias are resident; budget them at 2 buffers to stay safe even if
    # single-buffering (pl.Buffered(1)) is unavailable on this build.
    w_bytes = 2 * (_roundup(C, _sublane_mult(w_dtype)) * _roundup(D, 128)
                   * jnp.dtype(w_dtype).itemsize)
    b_bytes = 2 * (_roundup(1, _sublane_mult(b_dtype)) * _roundup(D, 128)
                   * jnp.dtype(b_dtype).itemsize)
    # x and out blocks are double-buffered by the Pallas pipeline.
    per_b = 2 * x_row + 2 * out_row

    avail = max(plan["budget"] - w_bytes - b_bytes, per_b)
    bt = max(1, min(B, avail // per_b))

    total_x = B * x_row
    if total_x <= (2 << 20):
        # Tiny input: one block is strictly better (each grid step ~0.35 us).
        return bt
    if plan["num_cores"] >= 2 and total_x > (32 << 20):
        # Give each TensorCore several pipelined steps (>= 4 total) so the DMA
        # prologue overlaps with compute, as long as blocks stay >= ~1 MiB.
        target = min(4, B)
        bt_for_target = max(1, _cdiv(B, target))
        if bt_for_target * x_row >= (1 << 20):
            bt = min(bt, bt_for_target)
    return bt


# ----------------------------------------------------------------------------
# Wrapper
# ----------------------------------------------------------------------------
def imfeat2wordvec(x, weight, bias):
    """Forward of ImFeat2WordVec.

    x: (B, C, H, W).  weight: (D, C) (PyTorch Linear layout).  bias: (D,).
    Returns (B, D).
    """
    B, C, H, W = x.shape
    D = weight.shape[0]
    HW = H * W
    out_dtype = jnp.result_type(x.dtype, weight.dtype, bias.dtype)

    # TODO(synk): when HW << 128 (7x7 / 14x14 maps) the lane dim is badly
    # under-occupied; folding a factor of C into the lane axis (or consuming a
    # (B, HW, C) producer layout) would give denser tiles, but needs upstream
    # layout cooperation -- a wrapper transpose of x would cost a full extra
    # HBM pass over x, which is worse than the kernel itself.

    x3 = x.reshape(B, C, HW)
    wt = weight.T                      # (C, D); one-off, tiny vs. x traffic
    b2 = bias.reshape(1, D)

    plan = _vmem_plan()
    Bt = _choose_batch_tile(B, C, HW, D, x.dtype, wt.dtype, b2.dtype,
                            out_dtype, plan)

    # No divisor-of-B restriction: pad batch to a multiple of Bt, slice output.
    B_pad = _cdiv(B, Bt) * Bt
    if B_pad != B:
        x3 = jnp.pad(x3, ((0, B_pad - B), (0, 0), (0, 0)))
    grid = (B_pad // Bt,)

    cost = pl.CostEstimate(
        flops=int(B * C * HW + 2 * B * C * D),
        transcendentals=0,
        bytes_accessed=int(B * C * HW * jnp.dtype(x.dtype).itemsize
                           + C * D * jnp.dtype(wt.dtype).itemsize
                           + D * jnp.dtype(b2.dtype).itemsize
                           + B * D * jnp.dtype(out_dtype).itemsize),
    )

    def build(single_buffer_weights):
        extra = ({"pipeline_mode": pl.Buffered(1)}
                 if single_buffer_weights else {})
        return pl.pallas_call(
            _imfeat2wordvec_kernel,
            out_shape=jax.ShapeDtypeStruct((B_pad, 1, D), out_dtype),
            grid_spec=pltpu.PrefetchScalarGridSpec(
                num_scalar_prefetch=0,
                grid=grid,
                in_specs=[
                    pl.BlockSpec((Bt, C, HW), lambda b: (b, 0, 0)),
                    pl.BlockSpec((C, D), lambda b: (0, 0), **extra),
                    pl.BlockSpec((1, D), lambda b: (0, 0), **extra),
                ],
                out_specs=pl.BlockSpec((Bt, 1, D), lambda b: (b, 0, 0)),
            ),
            compiler_params=pltpu.CompilerParams(
                dimension_semantics=("parallel",),
                vmem_limit_bytes=plan["vmem_limit"],
            ),
            cost_estimate=cost,
        )(x3, wt, b2)

    try:
        # Constant-index weight/bias: request a single resident buffer instead
        # of the default double-buffering (saves C*D*itemsize of dead VMEM).
        out3 = build(True)
    except Exception:
        # Fallback if this JAX/Mosaic build rejects single-buffered BlockSpecs.
        out3 = build(False)

    return out3[:B].reshape(B, D)


# ----------------------------------------------------------------------------
# Pure-JAX reference (matches the PyTorch forward)
# ----------------------------------------------------------------------------
def imfeat2wordvec_ref(x, weight, bias):
    B, C, H, W = x.shape
    pooled = jnp.mean(x.reshape(B, C, H * W), axis=2)    # (B, C)
    return pooled @ weight.T + bias                       # (B, D)


if __name__ == "__main__":
    # Small shapes consistent with the module.
    B, C, H, W = 2, 32, 16, 16     # in_channels = 32
    D = 64                         # out_channels = 64

    key = jax.random.PRNGKey(0)
    kx, kw, kb = jax.random.split(key, 3)

    x = jax.random.normal(kx, (B, C, H, W), dtype=jnp.float32)
    weight = 0.05 * jax.random.normal(kw, (D, C), dtype=jnp.float32)   # Linear(C, D) weight
    bias = 0.05 * jax.random.normal(kb, (D,), dtype=jnp.float32)        # Linear bias

    out = jax.block_until_ready(imfeat2wordvec(x, weight, bias))
    ref = imfeat2wordvec_ref(x, weight, bias)

    assert out.shape == (B, D)
    assert jnp.allclose(out, ref, atol=1e-5, rtol=1e-5), "mismatch vs reference"

    print("KERNEL_OK")
</pallas_src>

<mosaic_0001>
module attributes {stable_mosaic.version = 11 : i64} {
  func.func @_imfeat2wordvec_kernel(%arg0: i32, %arg1: memref<2x32x256xf32, #tpu.memory_space<vmem>>, %arg2: memref<32x64xf32, #tpu.memory_space<vmem>>, %arg3: memref<1x64xf32, #tpu.memory_space<vmem>>, %arg4: memref<2x1x64xf32, #tpu.memory_space<vmem>>) attributes {dimension_semantics = [#tpu.dimension_semantics<parallel>], iteration_bounds = array<i64: 1>, scalar_prefetch = 0 : i64, scratch_operands = 0 : i64, tpu.core_type = #tpu.core_type<tc>, window_params = [{transform_indices = @transform_0, window_bounds = array<i64: 2, 32, 256>}, {pipeline_mode = #tpu.pipeline_mode<synchronous>, transform_indices = @transform_1, window_bounds = array<i64: 32, 64>}, {pipeline_mode = #tpu.pipeline_mode<synchronous>, transform_indices = @transform_2, window_bounds = array<i64: 1, 64>}, {transform_indices = @transform_3, window_bounds = array<i64: 2, 1, 64>}]} {
    %c0 = arith.constant 0 : index
    %c0_0 = arith.constant 0 : index
    %c0_1 = arith.constant 0 : index
    %0 = vector.load %arg1[%c0, %c0_0, %c0_1] : memref<2x32x256xf32, #tpu.memory_space<vmem>>, vector<2x32x256xf32>
    %cst = arith.constant dense<0.000000e+00> : vector<2x32xf32>
    %1 = vector.multi_reduction <add>, %0, %cst [2] : vector<2x32x256xf32> to vector<2x32xf32>
    %cst_2 = arith.constant 3.906250e-03 : f32
    %2 = vector.broadcast %cst_2 : f32 to vector<2x32xf32>
    %3 = arith.mulf %1, %2 : vector<2x32xf32>
    %c0_3 = arith.constant 0 : index
    %c0_4 = arith.constant 0 : index
    %4 = vector.load %arg2[%c0_3, %c0_4] : memref<32x64xf32, #tpu.memory_space<vmem>>, vector<32x64xf32>
    %cst_5 = arith.constant dense<0.000000e+00> : vector<2x64xf32>
    %5 = tpu.matmul %3, %4, %cst_5 {dimension_numbers = #tpu.dot_dimension_numbers<[1], [0], [0], [1], [0, 0, 1, 1], [], []>} : vector<2x32xf32>, vector<32x64xf32>, vector<2x64xf32> -> vector<2x64xf32>
    %c0_6 = arith.constant 0 : index
    %c0_7 = arith.constant 0 : index
    %6 = vector.load %arg3[%c0_6, %c0_7] : memref<1x64xf32, #tpu.memory_space<vmem>>, vector<1x64xf32>
    %7 = vector.broadcast %6 : vector<1x64xf32> to vector<2x64xf32>
    %8 = arith.addf %5, %7 : vector<2x64xf32>
    %9 = vector.shape_cast %8 : vector<2x64xf32> to vector<2x1x64xf32>
    %c0_8 = arith.constant 0 : index
    %c0_9 = arith.constant 0 : index
    %c0_10 = arith.constant 0 : index
    %10 = vector.load %arg4[%c0_8, %c0_9, %c0_10] : memref<2x1x64xf32, #tpu.memory_space<vmem>>, vector<2x1x64xf32>
    tpu.vector_store %arg4[%c0_8, %c0_9, %c0_10], %9 {strides = array<i32>} : memref<2x1x64xf32, #tpu.memory_space<vmem>>, vector<2x1x64xf32>,
    return
  }
  func.func @transform_0(%arg0: i32) -> (i32, i32, i32) {
    %c0_i32 = arith.constant 0 : i32
    %c0_i32_0 = arith.constant 0 : i32
    %c0_i32_1 = arith.constant 0 : i32
    return %arg0, %c0_i32, %c0_i32_0 : i32, i32, i32
  }
  func.func @transform_1(%arg0: i32) -> (i32, i32) {
    %c0_i32 = arith.constant 0 : i32
    %c0_i32_0 = arith.constant 0 : i32
    %c0_i32_1 = arith.constant 0 : i32
    return %c0_i32, %c0_i32_0 : i32, i32
  }
  func.func @transform_2(%arg0: i32) -> (i32, i32) {
    %c0_i32 = arith.constant 0 : i32
    %c0_i32_0 = arith.constant 0 : i32
    %c0_i32_1 = arith.constant 0 : i32
    return %c0_i32, %c0_i32_0 : i32, i32
  }
  func.func @transform_3(%arg0: i32) -> (i32, i32, i32) {
    %c0_i32 = arith.constant 0 : i32
    %c0_i32_0 = arith.constant 0 : i32
    %c0_i32_1 = arith.constant 0 : i32
    return %arg0, %c0_i32, %c0_i32_0 : i32, i32, i32
  }
}

module attributes {stable_mosaic.version = 11 : i64} {
  func.func @_imfeat2wordvec_kernel(%arg0: i32, %arg1: memref<2x32x256xf32, #tpu.memory_space<vmem>>, %arg2: memref<32x64xf32, #tpu.memory_space<vmem>>, %arg3: memref<1x64xf32, #tpu.memory_space<vmem>>, %arg4: memref<2x1x64xf32, #tpu.memory_space<vmem>>) attributes {dimension_semantics = [#tpu.dimension_semantics<parallel>], iteration_bounds = array<i64: 1>, scalar_prefetch = 0 : i64, scratch_operands = 0 : i64, tpu.core_type = #tpu.core_type<tc>, window_params = [{transform_indices = @transform_0, window_bounds = array<i64: 2, 32, 256>}, {pipeline_mode = #tpu.pipeline_mode<synchronous>, transform_indices = @transform_1, window_bounds = array<i64: 32, 64>}, {pipeline_mode = #tpu.pipeline_mode<synchronous>, transform_indices = @transform_2, window_bounds = array<i64: 1, 64>}, {transform_indices = @transform_3, window_bounds = array<i64: 2, 1, 64>}]} {
    %c0 = arith.constant 0 : index
    %c0_0 = arith.constant 0 : index
    %c0_1 = arith.constant 0 : index
    %0 = vector.load %arg1[%c0, %c0_0, %c0_1] : memref<2x32x256xf32, #tpu.memory_space<vmem>>, vector<2x32x256xf32>
    %cst = arith.constant dense<0.000000e+00> : vector<2x32xf32>
    %1 = vector.multi_reduction <add>, %0, %cst [2] : vector<2x32x256xf32> to vector<2x32xf32>
    %cst_2 = arith.constant 3.906250e-03 : f32
    %2 = vector.broadcast %cst_2 : f32 to vector<2x32xf32>
    %3 = arith.mulf %1, %2 : vector<2x32xf32>
    %c0_3 = arith.constant 0 : index
    %c0_4 = arith.constant 0 : index
    %4 = vector.load %arg2[%c0_3, %c0_4] : memref<32x64xf32, #tpu.memory_space<vmem>>, vector<32x64xf32>
    %cst_5 = arith.constant dense<0.000000e+00> : vector<2x64xf32>
    %5 = tpu.matmul %3, %4, %cst_5 {dimension_numbers = #tpu.dot_dimension_numbers<[1], [0], [0], [1], [0, 0, 1, 1], [], []>} : vector<2x32xf32>, vector<32x64xf32>, vector<2x64xf32> -> vector<2x64xf32>
    %c0_6 = arith.constant 0 : index
    %c0_7 = arith.constant 0 : index
    %6 = vector.load %arg3[%c0_6, %c0_7] : memref<1x64xf32, #tpu.memory_space<vmem>>, vector<1x64xf32>
    %7 = vector.broadcast %6 : vector<1x64xf32> to vector<2x64xf32>
    %8 = arith.addf %5, %7 : vector<2x64xf32>
    %9 = vector.shape_cast %8 : vector<2x64xf32> to vector<2x1x64xf32>
    %c0_8 = arith.constant 0 : index
    %c0_9 = arith.constant 0 : index
    %c0_10 = arith.constant 0 : index
    %10 = vector.load %arg4[%c0_8, %c0_9, %c0_10] : memref<2x1x64xf32, #tpu.memory_space<vmem>>, vector<2x1x64xf32>
    tpu.vector_store %arg4[%c0_8, %c0_9, %c0_10], %9 {strides = array<i32>} : memref<2x1x64xf32, #tpu.memory_space<vmem>>, vector<2x1x64xf32>,
    return
  }
  func.func @transform_0(%arg0: i32) -> (i32, i32, i32) {
    %c0_i32 = arith.constant 0 : i32
    %c0_i32_0 = arith.constant 0 : i32
    %c0_i32_1 = arith.constant 0 : i32
    return %arg0, %c0_i32, %c0_i32_0 : i32, i32, i32
  }
  func.func @transform_1(%arg0: i32) -> (i32, i32) {
    %c0_i32 = arith.constant 0 : i32
    %c0_i32_0 = arith.constant 0 : i32
    %c0_i32_1 = arith.constant 0 : i32
    return %c0_i32, %c0_i32_0 : i32, i32
  }
  func.func @transform_2(%arg0: i32) -> (i32, i32) {
    %c0_i32 = arith.constant 0 : i32
    %c0_i32_0 = arith.constant 0 : i32
    %c0_i32_1 = arith.constant 0 : i32
    return %c0_i32, %c0_i32_0 : i32, i32
  }
  func.func @transform_3(%arg0: i32) -> (i32, i32, i32) {
    %c0_i32 = arith.constant 0 : i32
    %c0_i32_0 = arith.constant 0 : i32
    %c0_i32_1 = arith.constant 0 : i32
    return %arg0, %c0_i32, %c0_i32_0 : i32, i32, i32
  }
}

</mosaic_0001>

<llo_original>
// kernel: tpu_custom_call.1
$region0: #{tpu_custom_call.1}
  #allocation0 [shape = 'u32[]', space=smem, size = 0x4, offset = 0x4, fixed_abs, tag = 'smem constant byte address 0x4 - core index']
  #allocation1 [shape = 'u32[144,128]{1,0:T(1,128)}', space=vmem, size = 0x12000, scoped, tag = 'internal scratch']
  %s0 = inlined_call_operand.hbm [shape: f32[2,32,256], index: 0, kind: input, shape index: {}]
  %s1 = inlined_call_operand.hbm [shape: f32[32,64], index: 1, kind: input, shape index: {}]
  %s2 = inlined_call_operand.vmem [shape: f32[1,64], index: 2, kind: input, shape index: {}]
  %s3 = inlined_call_operand.hbm [shape: f32[2,1,64], index: 3, kind: output, shape index: {}]
  %s4 = sld [smem:[#allocation0]]
  $region30: #{tpu_custom_call.1} parent=0
    _
  %s6 = ssub.s32 1, %s4
  %s7 = scalar_select 0, %s6, %s4
  $region1: #{tpu_custom_call.1} parent=0
    #allocation2 [shape = 'u8[65536]{0}', space=vmem, size = 0x10000, scoped, tag = 'input window, operand 0, single buffered']
    #allocation3 [shape = 's32[1]{0}', space=sflag, size = 0x4, scoped, tag = 'scoped memory for tpu_custom_call.1']
    #allocation4 [shape = 's32[1]{0}', space=sflag, size = 0x4, scoped, tag = 'scoped memory for tpu_custom_call.1']
    #allocation5 [shape = 'u8[16384]{0}', space=vmem, size = 0x4000, scoped, tag = 'input window, operand 1, single buffered']
    #allocation6 [shape = 's32[1]{0}', space=sflag, size = 0x4, scoped, tag = 'scoped memory for tpu_custom_call.1']
    #allocation7 [shape = 'u8[1024]{0}', space=vmem, size = 0x400, scoped, tag = 'output window, operand 0, single buffered']
    %8 = vsyncpa [#allocation3], 0
    %9 = vsyncpa [#allocation6], 0
    %10 = vsyncpa [#allocation4], 0
    // Predicated region
    $region2: #{tpu_custom_call.1} parent=1 // pred_check
      _
    $region3: #{tpu_custom_call.1} parent=1 // pred_check_branch
      %12 = sbr.rel (0) target = $region5
    $region4: #{tpu_custom_call.1} parent=1 // pred_region
      %s14 = ssub.s32 2048, 2048
      %15 = vsyncadd [#allocation3], %s14
      %s16 = sshll.u32 [#allocation2], 4
      %s17 = int_to_ptr.vmem [resolvable:$true] %s16
      %22 = dma.hbm_to_vmem [thread:$0]  %s0, 2048, %s17, [#allocation3], 256, 256, 16
    $region5: #{tpu_custom_call.1} parent=1 // pred_fallthru
      _
    // Predicated region
    $region6: #{tpu_custom_call.1} parent=1 // pred_check
      _
    $region7: #{tpu_custom_call.1} parent=1 // pred_check_branch
      %24 = sbr.rel (0) target = $region9
    $region8: #{tpu_custom_call.1} parent=1 // pred_region
      %s26 = ssub.s32 512, 512
      %27 = vsyncadd [#allocation6], %s26
      %s28 = sshll.u32 [#allocation5], 4
      %s29 = int_to_ptr.vmem [resolvable:$true] %s28
      %34 = dma.hbm_to_vmem [thread:$0]  %s1, 512, %s29, [#allocation6], 128, 128, 8
    $region9: #{tpu_custom_call.1} parent=1 // pred_fallthru
      _
    // Predicated region
    $region10: #{tpu_custom_call.1} parent=1 // pred_check
      _
    $region11: #{tpu_custom_call.1} parent=1 // pred_check_branch
      %36 = sbr.rel (0) target = $region13
    $region12: #{tpu_custom_call.1} parent=1 // pred_region
      _
    $region13: #{tpu_custom_call.1} parent=1 // pred_fallthru
      _
    // Predicated region
    $region14: #{tpu_custom_call.1} parent=1 // pred_check
      _
    $region15: #{tpu_custom_call.1} parent=1 // pred_check_branch
      %38 = sbr.rel (0) target = $region17
    $region16: #{tpu_custom_call.1} parent=1 // pred_region
      %39 = dma.done [#allocation3], 2048
    $region17: #{tpu_custom_call.1} parent=1 // pred_fallthru
      _
    // Predicated region
    $region18: #{tpu_custom_call.1} parent=1 // pred_check
      _
    $region19: #{tpu_custom_call.1} parent=1 // pred_check_branch
      %41 = sbr.rel (0) target = $region21
    $region20: #{tpu_custom_call.1} parent=1 // pred_region
      %42 = dma.done [#allocation6], 512
    $region21: #{tpu_custom_call.1} parent=1 // pred_fallthru
      _
    %v43 = vld [vmem:[#allocation2] sm:$0xff]
    %v44 = vld [vmem:[#allocation2 + $0x8] sm:$0xff]
    %v45 = vld [vmem:[#allocation2 + $0x10] sm:$0xff]
    %v46 = vld [vmem:[#allocation2 + $0x18] sm:$0xff]
    %v47 = vld [vmem:[#allocation2 + $0x20] sm:$0xff]
    %v48 = vld [vmem:[#allocation2 + $0x28] sm:$0xff]
    %v49 = vld [vmem:[#allocation2 + $0x30] sm:$0xff]
    %v50 = vld [vmem:[#allocation2 + $0x38] sm:$0xff]
    %v51 = vld [vmem:[#allocation2 + $0x40] sm:$0xff]
    %v52 = vld [vmem:[#allocation2 + $0x48] sm:$0xff]
    %v53 = vld [vmem:[#allocation2 + $0x50] sm:$0xff]
    %v54 = vld [vmem:[#allocation2 + $0x58] sm:$0xff]
    %v55 = vld [vmem:[#allocation2 + $0x60] sm:$0xff]
    %v56 = vld [vmem:[#allocation2 + $0x68] sm:$0xff]
    %v57 = vld [vmem:[#allocation2 + $0x70] sm:$0xff]
    %v58 = vld [vmem:[#allocation2 + $0x78] sm:$0xff]
    %v59 = vadd.f32 %v43, %v44
    %60 = vadd.xlane.f32.xlu0 %v59
    %v61 = vpop.xlane.xlu0 %60
    %v62 = vadd.f32 %v45, %v46
    %63 = vadd.xlane.f32.xlu0 %v62
    %v64 = vpop.xlane.xlu0 %63
    %v65 = vadd.f32 %v47, %v48
    %66 = vadd.xlane.f32.xlu0 %v65
    %v67 = vpop.xlane.xlu0 %66
    %v68 = vadd.f32 %v49, %v50
    %69 = vadd.xlane.f32.xlu0 %v68
    %v70 = vpop.xlane.xlu0 %69
    %v71 = vadd.f32 %v51, %v52
    %72 = vadd.xlane.f32.xlu0 %v71
    %v73 = vpop.xlane.xlu0 %72
    %v74 = vadd.f32 %v53, %v54
    %75 = vadd.xlane.f32.xlu0 %v74
    %v76 = vpop.xlane.xlu0 %75
    %v77 = vadd.f32 %v55, %v56
    %78 = vadd.xlane.f32.xlu0 %v77
    %v79 = vpop.xlane.xlu0 %78
    %v80 = vadd.f32 %v57, %v58
    %81 = vadd.xlane.f32.xlu0 %v80
    %v82 = vpop.xlane.xlu0 %81
    %v83 = vmul.f32 %v61, 0.00390625
    %v84 = vmul.f32 %v64, 0.00390625
    %v85 = vmul.f32 %v67, 0.00390625
    %v86 = vmul.f32 %v70, 0.00390625
    %v87 = vmul.f32 %v73, 0.00390625
    %v88 = vmul.f32 %v76, 0.00390625
    %v89 = vmul.f32 %v79, 0.00390625
    %v90 = vmul.f32 %v82, 0.00390625
    %v91 = vld [vmem:[#allocation5] sm:$0xff]
    %v92 = vld [vmem:[#allocation5 + $0x8] sm:$0xff]
    %v93 = vld [vmem:[#allocation5 + $0x10] sm:$0xff]
    %v94 = vld [vmem:[#allocation5 + $0x18] sm:$0xff]
    %v95 = vld [vmem:[%s2] sm:$0x1]
    %v97 = vlaneseq
    %v98 = vshrl.u32 %v97, 7
    %v99 = vsub.s32 0, %v98
    %v100 = vrot.slane %v95, %v99
    %v110 = vlaneseq
    %v111 = vand.u32 %v110, 127
    %v112 = vlaneseq
    %v113 = vshrl.u32 %v112, 7
    %v114 = vsub.s32 %v111, %v113
    %v115 = vrot.slane %v83, %v114
    %v116 = vadd.s32 %v111, 4294967288
    %v117 = vlaneseq
    %v118 = vshrl.u32 %v117, 7
    %v119 = vsub.s32 %v116, %v118
    %v120 = vrot.slane %v84, %v119
    %vm121 = vcmask 130112
    %v122 = vsel %vm121, %v120, %v115
    %v123 = vadd.s32 %v111, 4294967280
    %v124 = vlaneseq
    %v125 = vshrl.u32 %v124, 7
    %v126 = vsub.s32 %v123, %v125
    %v127 = vrot.slane %v85, %v126
    %vm128 = vcmask 195712
    %v129 = vsel %vm128, %v127, %v122
    %v130 = vadd.s32 %v111, 4294967272
    %v131 = vlaneseq
    %v132 = vshrl.u32 %v131, 7
    %v133 = vsub.s32 %v130, %v132
    %v134 = vrot.slane %v86, %v133
    %vm135 = vcmask 261312
    %v136 = vsel %vm135, %v134, %v129
    %v137 = vlaneseq
    %v138 = vshrl.u32 %v137, 7
    %v139 = vsub.s32 %v111, %v138
    %v140 = vrot.slane %v87, %v139
    %v141 = vlaneseq
    %v142 = vshrl.u32 %v141, 7
    %v143 = vsub.s32 %v116, %v142
    %v144 = vrot.slane %v88, %v143
    %v145 = vsel %vm121, %v144, %v140
    %v146 = vlaneseq
    %v147 = vshrl.u32 %v146, 7
    %v148 = vsub.s32 %v123, %v147
    %v149 = vrot.slane %v89, %v148
    %v150 = vsel %vm128, %v149, %v145
    %v151 = vlaneseq
    %v152 = vshrl.u32 %v151, 7
    %v153 = vsub.s32 %v130, %v152
    %v154 = vrot.slane %v90, %v153
    %v155 = vsel %vm135, %v154, %v150
    %vm156 = vcmask 1041409
    %v157 = vsel %vm156, %v155, %v136
    %vm158 = vcmask 261120
    %v159 = vsel %vm158, %v157, 0
    %161 = vmatprep.subr.mxu0 0.0
    %162 = vmatpush1.msra.mxu0 %v91
    %163 = vmatprep.subr.mxu0 0.0
    %164 = vmatpush1.msra.mxu0 %v92
    %165 = vmatprep.subr.mxu0 0.0
    %166 = vmatpush1.msra.mxu0 %v93
    %167 = vmatprep.subr.mxu0 0.0
    %168 = vmatpush1.msra.mxu0 %v94
    %169 = vmatprep.subr.mxu0 0.0
    %170 = vmatpush1.msra.mxu0 0.0
    %171 = vmatprep.subr.mxu0 0.0
    %172 = vmatpush1.msra.mxu0 0.0
    %173 = vmatprep.subr.mxu0 0.0
    %174 = vmatpush1.msra.mxu0 0.0
    %175 = vmatprep.subr.mxu0 0.0
    %176 = vmatpush1.msra.mxu0 0.0
    %177 = vmatprep.subr.mxu0 0.0
    %178 = vmatpush1.msra.mxu0 0.0
    %179 = vmatprep.subr.mxu0 0.0
    %180 = vmatpush1.msra.mxu0 0.0
    %181 = vmatprep.subr.mxu0 0.0
    %182 = vmatpush1.msra.mxu0 0.0
    %183 = vmatprep.subr.mxu0 0.0
    %184 = vmatpush1.msra.mxu0 0.0
    %185 = vmatprep.subr.mxu0 0.0
    %186 = vmatpush1.msra.mxu0 0.0
    %187 = vmatprep.subr.mxu0 0.0
    %188 = vmatpush1.msra.mxu0 0.0
    %189 = vmatprep.subr.mxu0 0.0
    %190 = vmatpush1.msra.mxu0 0.0
    %191 = vmatprep.subr.mxu0 0.0
    %192 = vmatpush1.msra.mxu0 0.0
    %193 = vmatprep.subr.mxu0 0.0
    %194 = vmatpush1.msra.mxu0 0.0
    %195 = vmatprep.subr.mxu0 0.0
    %196 = vmatpush1.msra.mxu0 0.0
    %197 = vmatprep.subr.mxu0 0.0
    %198 = vmatpush1.msra.mxu0 0.0
    %199 = vmatprep.subr.mxu0 0.0
    %200 = vmatpush1.msra.mxu0 0.0
    %201 = vmatprep.subr.mxu0 0.0
    %202 = vmatpush1.msra.mxu0 0.0
    %203 = vmatprep.subr.mxu0 0.0
    %204 = vmatpush1.msra.mxu0 0.0
    %205 = vmatprep.subr.mxu0 0.0
    %206 = vmatpush1.msra.mxu0 0.0
    %207 = vmatprep.subr.mxu0 0.0
    %208 = vmatpush1.msra.mxu0 0.0
    %209 = vmatprep.subr.mxu0 0.0
    %210 = vmatpush1.msra.mxu0 0.0
    %211 = vmatprep.subr.mxu0 0.0
    %212 = vmatpush1.msra.mxu0 0.0
    %213 = vmatprep.subr.mxu0 0.0
    %214 = vmatpush1.msra.mxu0 0.0
    %215 = vmatprep.subr.mxu0 0.0
    %216 = vmatpush1.msra.mxu0 0.0
    %217 = vmatprep.subr.mxu0 0.0
    %218 = vmatpush1.msra.mxu0 0.0
    %219 = vmatprep.subr.mxu0 0.0
    %220 = vmatpush1.msra.mxu0 0.0
    %221 = vmatprep.subr.mxu0 0.0
    %222 = vmatpush1.msra.mxu0 0.0
    %223 = vmatprep.subr.mxu0 0.0
    %224 = vmatpush1.msra.mxu0 0.0
    %225 = vmatprep.mubr.f32.mxu0 0.0
    %226 = vmatmul.mubr.f32.gmra.mrb[0].mxu0 %v159
    %v227 = vpop.f32.mrb[0].mxu0
    %v228 = vadd.f32 %v100, %v227
    %v229 = vpop.f32.mrb[0].mxu0
    %230 = vdwg.mxu0
    %v233 = vunpack.c.l.s4 1966171168
    %v234 = vunpack.c.0.s8 %v233
    %v235 = vlaneseq
    %v236 = vshrl.u32 %v235, 7
    %v237 = vsub.s32 %v234, %v236
    %v238 = vrot.slane %v228, %v237
    %v239 = vcombine.high %v238, %v238
    %v241 = vunpack.c.l.s4 1966171168
    %v242 = vunpack.c.0.s8 %v241
    %v243 = vlaneseq
    %v244 = vshrl.u32 %v243, 7
    %v245 = vsub.s32 %v242, %v244
    %v246 = vrot.slane %v238, %v245
    %v248 = vunpack.c.l.s4 1966171168
    %v249 = vunpack.c.0.s8 %v248
    %v250 = vlaneseq
    %v251 = vshrl.u32 %v250, 7
    %v252 = vsub.s32 %v249, %v251
    %v253 = vrot.slane %v239, %v252
    %vm256 = vcmask 516096
    %257 = vst.msk [vmem:[#allocation7] sm:$0x1] %vm256, %v246
    %258 = vst.msk [vmem:[#allocation7 + $0x1] sm:$0x1] %vm256, %v253
    // Predicated region
    $region22: #{tpu_custom_call.1} parent=1 // pred_check
      _
    $region23: #{tpu_custom_call.1} parent=1 // pred_check_branch
      %260 = sbr.rel (0) target = $region25
    $region24: #{tpu_custom_call.1} parent=1 // pred_region
      %s262 = ssub.s32 32, 32
      %263 = vsyncadd [#allocation4], %s262
      %s264 = sshll.u32 [#allocation7], 4
      %s265 = int_to_ptr.vmem [resolvable:$true] %s264
      %270 = dma.vmem_to_hbm [thread:$0]  %s265, 32, %s3, [#allocation4], 16, 16, 1
    $region25: #{tpu_custom_call.1} parent=1 // pred_fallthru
      _
    // Predicated region
    $region26: #{tpu_custom_call.1} parent=1 // pred_check
      _
    $region27: #{tpu_custom_call.1} parent=1 // pred_check_branch
      %272 = sbr.rel (0) target = $region29
    $region28: #{tpu_custom_call.1} parent=1 // pred_region
      %273 = dma.done [#allocation4], 32
    $region29: #{tpu_custom_call.1} parent=1 // pred_fallthru
      _
    %274 = vsyncpa [#allocation3], 1
    %275 = vsyncpa [#allocation6], 1
    %276 = vsyncpa [#allocation4], 1

// kernel: tpu_custom_call.1
$region0: #{tpu_custom_call.1}
  #allocation0 [shape = 'u32[]', space=smem, size = 0x4, offset = 0x4, fixed_abs, tag = 'smem constant byte address 0x4 - core index']
  #allocation1 [shape = 'u32[144,128]{1,0:T(1,128)}', space=vmem, size = 0x12000, scoped, tag = 'internal scratch']
  %s0 = inlined_call_operand.hbm [shape: f32[2,32,256], index: 0, kind: input, shape index: {}]
  %s1 = inlined_call_operand.hbm [shape: f32[32,64], index: 1, kind: input, shape index: {}]
  %s2 = inlined_call_operand.vmem [shape: f32[1,64], index: 2, kind: input, shape index: {}]
  %s3 = inlined_call_operand.hbm [shape: f32[2,1,64], index: 3, kind: output, shape index: {}]
  %s4 = sld [smem:[#allocation0]]
  $region30: #{tpu_custom_call.1} parent=0
    _
  %s6 = ssub.s32 1, %s4
  %s7 = scalar_select 0, %s6, %s4
  $region1: #{tpu_custom_call.1} parent=0
    #allocation2 [shape = 'u8[65536]{0}', space=vmem, size = 0x10000, scoped, tag = 'input window, operand 0, single buffered']
    #allocation3 [shape = 's32[1]{0}', space=sflag, size = 0x4, scoped, tag = 'scoped memory for tpu_custom_call.1']
    #allocation4 [shape = 's32[1]{0}', space=sflag, size = 0x4, scoped, tag = 'scoped memory for tpu_custom_call.1']
    #allocation5 [shape = 'u8[16384]{0}', space=vmem, size = 0x4000, scoped, tag = 'input window, operand 1, single buffered']
    #allocation6 [shape = 's32[1]{0}', space=sflag, size = 0x4, scoped, tag = 'scoped memory for tpu_custom_call.1']
    #allocation7 [shape = 'u8[1024]{0}', space=vmem, size = 0x400, scoped, tag = 'output window, operand 0, single buffered']
    %8 = vsyncpa [#allocation3], 0
    %9 = vsyncpa [#allocation6], 0
    %10 = vsyncpa [#allocation4], 0
    // Predicated region
    $region2: #{tpu_custom_call.1} parent=1 // pred_check
      _
    $region3: #{tpu_custom_call.1} parent=1 // pred_check_branch
      %12 = sbr.rel (0) target = $region5
    $region4: #{tpu_custom_call.1} parent=1 // pred_region
      %s14 = ssub.s32 2048, 2048
      %15 = vsyncadd [#allocation3], %s14
      %s16 = sshll.u32 [#allocation2], 4
      %s17 = int_to_ptr.vmem [resolvable:$true] %s16
      %22 = dma.hbm_to_vmem [thread:$0]  %s0, 2048, %s17, [#allocation3], 256, 256, 16
    $region5: #{tpu_custom_call.1} parent=1 // pred_fallthru
      _
    // Predicated region
    $region6: #{tpu_custom_call.1} parent=1 // pred_check
      _
    $region7: #{tpu_custom_call.1} parent=1 // pred_check_branch
      %24 = sbr.rel (0) target = $region9
    $region8: #{tpu_custom_call.1} parent=1 // pred_region
      %s26 = ssub.s32 512, 512
      %27 = vsyncadd [#allocation6], %s26
      %s28 = sshll.u32 [#allocation5], 4
      %s29 = int_to_ptr.vmem [resolvable:$true] %s28
      %34 = dma.hbm_to_vmem [thread:$0]  %s1, 512, %s29, [#allocation6], 128, 128, 8
    $region9: #{tpu_custom_call.1} parent=1 // pred_fallthru
      _
    // Predicated region
    $region10: #{tpu_custom_call.1} parent=1 // pred_check
      _
    $region11: #{tpu_custom_call.1} parent=1 // pred_check_branch
      %36 = sbr.rel (0) target = $region13
    $region12: #{tpu_custom_call.1} parent=1 // pred_region
      _
    $region13: #{tpu_custom_call.1} parent=1 // pred_fallthru
      _
    // Predicated region
    $region14: #{tpu_custom_call.1} parent=1 // pred_check
      _
    $region15: #{tpu_custom_call.1} parent=1 // pred_check_branch
      %38 = sbr.rel (0) target = $region17
    $region16: #{tpu_custom_call.1} parent=1 // pred_region
      %39 = dma.done [#allocation3], 2048
    $region17: #{tpu_custom_call.1} parent=1 // pred_fallthru
      _
    // Predicated region
    $region18: #{tpu_custom_call.1} parent=1 // pred_check
      _
    $region19: #{tpu_custom_call.1} parent=1 // pred_check_branch
      %41 = sbr.rel (0) target = $region21
    $region20: #{tpu_custom_call.1} parent=1 // pred_region
      %42 = dma.done [#allocation6], 512
    $region21: #{tpu_custom_call.1} parent=1 // pred_fallthru
      _
    %v43 = vld [vmem:[#allocation2] sm:$0xff]
    %v44 = vld [vmem:[#allocation2 + $0x8] sm:$0xff]
    %v45 = vld [vmem:[#allocation2 + $0x10] sm:$0xff]
    %v46 = vld [vmem:[#allocation2 + $0x18] sm:$0xff]
    %v47 = vld [vmem:[#allocation2 + $0x20] sm:$0xff]
    %v48 = vld [vmem:[#allocation2 + $0x28] sm:$0xff]
    %v49 = vld [vmem:[#allocation2 + $0x30] sm:$0xff]
    %v50 = vld [vmem:[#allocation2 + $0x38] sm:$0xff]
    %v51 = vld [vmem:[#allocation2 + $0x40] sm:$0xff]
    %v52 = vld [vmem:[#allocation2 + $0x48] sm:$0xff]
    %v53 = vld [vmem:[#allocation2 + $0x50] sm:$0xff]
    %v54 = vld [vmem:[#allocation2 + $0x58] sm:$0xff]
    %v55 = vld [vmem:[#allocation2 + $0x60] sm:$0xff]
    %v56 = vld [vmem:[#allocation2 + $0x68] sm:$0xff]
    %v57 = vld [vmem:[#allocation2 + $0x70] sm:$0xff]
    %v58 = vld [vmem:[#allocation2 + $0x78] sm:$0xff]
    %v59 = vadd.f32 %v43, %v44
    %60 = vadd.xlane.f32.xlu0 %v59
    %v61 = vpop.xlane.xlu0 %60
    %v62 = vadd.f32 %v45, %v46
    %63 = vadd.xlane.f32.xlu0 %v62
    %v64 = vpop.xlane.xlu0 %63
    %v65 = vadd.f32 %v47, %v48
    %66 = vadd.xlane.f32.xlu0 %v65
    %v67 = vpop.xlane.xlu0 %66
    %v68 = vadd.f32 %v49, %v50
    %69 = vadd.xlane.f32.xlu0 %v68
    %v70 = vpop.xlane.xlu0 %69
    %v71 = vadd.f32 %v51, %v52
    %72 = vadd.xlane.f32.xlu0 %v71
    %v73 = vpop.xlane.xlu0 %72
    %v74 = vadd.f32 %v53, %v54
    %75 = vadd.xlane.f32.xlu0 %v74
    %v76 = vpop.xlane.xlu0 %75
    %v77 = vadd.f32 %v55, %v56
    %78 = vadd.xlane.f32.xlu0 %v77
    %v79 = vpop.xlane.xlu0 %78
    %v80 = vadd.f32 %v57, %v58
    %81 = vadd.xlane.f32.xlu0 %v80
    %v82 = vpop.xlane.xlu0 %81
    %v83 = vmul.f32 %v61, 0.00390625
    %v84 = vmul.f32 %v64, 0.00390625
    %v85 = vmul.f32 %v67, 0.00390625
    %v86 = vmul.f32 %v70, 0.00390625
    %v87 = vmul.f32 %v73, 0.00390625
    %v88 = vmul.f32 %v76, 0.00390625
    %v89 = vmul.f32 %v79, 0.00390625
    %v90 = vmul.f32 %v82, 0.00390625
    %v91 = vld [vmem:[#allocation5] sm:$0xff]
    %v92 = vld [vmem:[#allocation5 + $0x8] sm:$0xff]
    %v93 = vld [vmem:[#allocation5 + $0x10] sm:$0xff]
    %v94 = vld [vmem:[#allocation5 + $0x18] sm:$0xff]
    %v95 = vld [vmem:[%s2] sm:$0x1]
    %v97 = vlaneseq
    %v98 = vshrl.u32 %v97, 7
    %v99 = vsub.s32 0, %v98
    %v100 = vrot.slane %v95, %v99
    %v110 = vlaneseq
    %v111 = vand.u32 %v110, 127
    %v112 = vlaneseq
    %v113 = vshrl.u32 %v112, 7
    %v114 = vsub.s32 %v111, %v113
    %v115 = vrot.slane %v83, %v114
    %v116 = vadd.s32 %v111, 4294967288
    %v117 = vlaneseq
    %v118 = vshrl.u32 %v117, 7
    %v119 = vsub.s32 %v116, %v118
    %v120 = vrot.slane %v84, %v119
    %vm121 = vcmask 130112
    %v122 = vsel %vm121, %v120, %v115
    %v123 = vadd.s32 %v111, 4294967280
    %v124 = vlaneseq
    %v125 = vshrl.u32 %v124, 7
    %v126 = vsub.s32 %v123, %v125
    %v127 = vrot.slane %v85, %v126
    %vm128 = vcmask 195712
    %v129 = vsel %vm128, %v127, %v122
    %v130 = vadd.s32 %v111, 4294967272
    %v131 = vlaneseq
    %v132 = vshrl.u32 %v131, 7
    %v133 = vsub.s32 %v130, %v132
    %v134 = vrot.slane %v86, %v133
    %vm135 = vcmask 261312
    %v136 = vsel %vm135, %v134, %v129
    %v137 = vlaneseq
    %v138 = vshrl.u32 %v137, 7
    %v139 = vsub.s32 %v111, %v138
    %v140 = vrot.slane %v87, %v139
    %v141 = vlaneseq
    %v142 = vshrl.u32 %v141, 7
    %v143 = vsub.s32 %v116, %v142
    %v144 = vrot.slane %v88, %v143
    %v145 = vsel %vm121, %v144, %v140
    %v146 = vlaneseq
    %v147 = vshrl.u32 %v146, 7
    %v148 = vsub.s32 %v123, %v147
    %v149 = vrot.slane %v89, %v148
    %v150 = vsel %vm128, %v149, %v145
    %v151 = vlaneseq
    %v152 = vshrl.u32 %v151, 7
    %v153 = vsub.s32 %v130, %v152
    %v154 = vrot.slane %v90, %v153
    %v155 = vsel %vm135, %v154, %v150
    %vm156 = vcmask 1041409
    %v157 = vsel %vm156, %v155, %v136
    %vm158 = vcmask 261120
    %v159 = vsel %vm158, %v157, 0
    %161 = vmatprep.subr.mxu0 0.0
    %162 = vmatpush1.msra.mxu0 %v91
    %163 = vmatprep.subr.mxu0 0.0
    %164 = vmatpush1.msra.mxu0 %v92
    %165 = vmatprep.subr.mxu0 0.0
    %166 = vmatpush1.msra.mxu0 %v93
    %167 = vmatprep.subr.mxu0 0.0
    %168 = vmatpush1.msra.mxu0 %v94
    %169 = vmatprep.subr.mxu0 0.0
    %170 = vmatpush1.msra.mxu0 0.0
    %171 = vmatprep.subr.mxu0 0.0
    %172 = vmatpush1.msra.mxu0 0.0
    %173 = vmatprep.subr.mxu0 0.0
    %174 = vmatpush1.msra.mxu0 0.0
    %175 = vmatprep.subr.mxu0 0.0
    %176 = vmatpush1.msra.mxu0 0.0
    %177 = vmatprep.subr.mxu0 0.0
    %178 = vmatpush1.msra.mxu0 0.0
    %179 = vmatprep.subr.mxu0 0.0
    %180 = vmatpush1.msra.mxu0 0.0
    %181 = vmatprep.subr.mxu0 0.0
    %182 = vmatpush1.msra.mxu0 0.0
    %183 = vmatprep.subr.mxu0 0.0
    %184 = vmatpush1.msra.mxu0 0.0
    %185 = vmatprep.subr.mxu0 0.0
    %186 = vmatpush1.msra.mxu0 0.0
    %187 = vmatprep.subr.mxu0 0.0
    %188 = vmatpush1.msra.mxu0 0.0
    %189 = vmatprep.subr.mxu0 0.0
    %190 = vmatpush1.msra.mxu0 0.0
    %191 = vmatprep.subr.mxu0 0.0
    %192 = vmatpush1.msra.mxu0 0.0
    %193 = vmatprep.subr.mxu0 0.0
    %194 = vmatpush1.msra.mxu0 0.0
    %195 = vmatprep.subr.mxu0 0.0
    %196 = vmatpush1.msra.mxu0 0.0
    %197 = vmatprep.subr.mxu0 0.0
    %198 = vmatpush1.msra.mxu0 0.0
    %199 = vmatprep.subr.mxu0 0.0
    %200 = vmatpush1.msra.mxu0 0.0
    %201 = vmatprep.subr.mxu0 0.0
    %202 = vmatpush1.msra.mxu0 0.0
    %203 = vmatprep.subr.mxu0 0.0
    %204 = vmatpush1.msra.mxu0 0.0
    %205 = vmatprep.subr.mxu0 0.0
    %206 = vmatpush1.msra.mxu0 0.0
    %207 = vmatprep.subr.mxu0 0.0
    %208 = vmatpush1.msra.mxu0 0.0
    %209 = vmatprep.subr.mxu0 0.0
    %210 = vmatpush1.msra.mxu0 0.0
    %211 = vmatprep.subr.mxu0 0.0
    %212 = vmatpush1.msra.mxu0 0.0
    %213 = vmatprep.subr.mxu0 0.0
    %214 = vmatpush1.msra.mxu0 0.0
    %215 = vmatprep.subr.mxu0 0.0
    %216 = vmatpush1.msra.mxu0 0.0
    %217 = vmatprep.subr.mxu0 0.0
    %218 = vmatpush1.msra.mxu0 0.0
    %219 = vmatprep.subr.mxu0 0.0
    %220 = vmatpush1.msra.mxu0 0.0
    %221 = vmatprep.subr.mxu0 0.0
    %222 = vmatpush1.msra.mxu0 0.0
    %223 = vmatprep.subr.mxu0 0.0
    %224 = vmatpush1.msra.mxu0 0.0
    %225 = vmatprep.mubr.f32.mxu0 0.0
    %226 = vmatmul.mubr.f32.gmra.mrb[0].mxu0 %v159
    %v227 = vpop.f32.mrb[0].mxu0
    %v228 = vadd.f32 %v100, %v227
    %v229 = vpop.f32.mrb[0].mxu0
    %230 = vdwg.mxu0
    %v233 = vunpack.c.l.s4 1966171168
    %v234 = vunpack.c.0.s8 %v233
    %v235 = vlaneseq
    %v236 = vshrl.u32 %v235, 7
    %v237 = vsub.s32 %v234, %v236
    %v238 = vrot.slane %v228, %v237
    %v239 = vcombine.high %v238, %v238
    %v241 = vunpack.c.l.s4 1966171168
    %v242 = vunpack.c.0.s8 %v241
    %v243 = vlaneseq
    %v244 = vshrl.u32 %v243, 7
    %v245 = vsub.s32 %v242, %v244
    %v246 = vrot.slane %v238, %v245
    %v248 = vunpack.c.l.s4 1966171168
    %v249 = vunpack.c.0.s8 %v248
    %v250 = vlaneseq
    %v251 = vshrl.u32 %v250, 7
    %v252 = vsub.s32 %v249, %v251
    %v253 = vrot.slane %v239, %v252
    %vm256 = vcmask 516096
    %257 = vst.msk [vmem:[#allocation7] sm:$0x1] %vm256, %v246
    %258 = vst.msk [vmem:[#allocation7 + $0x1] sm:$0x1] %vm256, %v253
    // Predicated region
    $region22: #{tpu_custom_call.1} parent=1 // pred_check
      _
    $region23: #{tpu_custom_call.1} parent=1 // pred_check_branch
      %260 = sbr.rel (0) target = $region25
    $region24: #{tpu_custom_call.1} parent=1 // pred_region
      %s262 = ssub.s32 32, 32
      %263 = vsyncadd [#allocation4], %s262
      %s264 = sshll.u32 [#allocation7], 4
      %s265 = int_to_ptr.vmem [resolvable:$true] %s264
      %270 = dma.vmem_to_hbm [thread:$0]  %s265, 32, %s3, [#allocation4], 16, 16, 1
    $region25: #{tpu_custom_call.1} parent=1 // pred_fallthru
      _
    // Predicated region
    $region26: #{tpu_custom_call.1} parent=1 // pred_check
      _
    $region27: #{tpu_custom_call.1} parent=1 // pred_check_branch
      %272 = sbr.rel (0) target = $region29
    $region28: #{tpu_custom_call.1} parent=1 // pred_region
      %273 = dma.done [#allocation4], 32
    $region29: #{tpu_custom_call.1} parent=1 // pred_fallthru
      _
    %274 = vsyncpa [#allocation3], 1
    %275 = vsyncpa [#allocation6], 1
    %276 = vsyncpa [#allocation4], 1

</llo_original>
